<compile_context>
chip_gen: v7x
topology: tpu7x:2x2x1
jax: 0.10.0
libtpu: 0.0.40
codegen_flags: <defaults>
</compile_context>

<pallas_src>
import functools

import numpy as np
import jax
import jax.numpy as jnp
from jax import lax
from jax.experimental import pallas as pl
from jax.experimental.pallas import tpu as pltpu


# ----------------------------------------------------------------------------
# Host-side sampling (vectorized numpy, no device syncs).
# NOTE: replicates the distribution / exclusive-high semantics of
# torch.rand / torch.randint but does not bit-match torch's RNG stream.
# ----------------------------------------------------------------------------
def _sample_cutout_params(rng, sideY, sideX, cut_size, cutn, cut_pow):
    max_size = min(sideX, sideY)
    min_size = min(sideX, sideY, cut_size)
    u = rng.random(cutn)
    sizes = (u ** cut_pow * (max_size - min_size) + min_size).astype(np.int64)
    offx = rng.integers(0, sideX - sizes + 1)
    offy = rng.integers(0, sideY - sizes + 1)
    return sizes, offx, offy


# ----------------------------------------------------------------------------
# On-device weight construction (runs inside the jitted wrapper, not host).
# PyTorch adaptive_avg_pool2d: output bin i of a length-s crop averages input
# rows floor(i*s/cs) .. ceil((i+1)*s/cs) - 1 of the cropped region.
# ----------------------------------------------------------------------------
def _pool_weights(side, sizes, offsets, cut_size):
    sizes = sizes[:, None].astype(jnp.int32)            # (N, 1)
    offsets = offsets[:, None].astype(jnp.int32)        # (N, 1)
    i = jnp.arange(cut_size, dtype=jnp.int32)[None, :]  # (1, cs)
    starts = (i * sizes) // cut_size                    # (N, cs)
    ends = -((-(i + 1) * sizes) // cut_size)            # (N, cs)  ceil division
    counts = (ends - starts).astype(jnp.float32)        # (N, cs)  always >= 1
    pos = jnp.arange(side, dtype=jnp.int32)[None, None, :]
    lo = (offsets + starts)[:, :, None]
    hi = (offsets + ends)[:, :, None]
    w = ((pos >= lo) & (pos < hi)).astype(jnp.float32) / counts[:, :, None]
    return w                                            # (N, cs, side) float32


# ----------------------------------------------------------------------------
# Pallas kernel: one (batch b, channel c, cutout-group k) triple per grid step.
# ----------------------------------------------------------------------------
def _cutout_kernel(x_ref, wy_ref, wxt_ref, o_ref, *, nt, cs):
    # x_ref   : (1, 1, H, W)       one channel of one image (VMEM-resident
    #                              across the inner cutout-group axis)
    # wy_ref  : (1, NT*cs, H)      stacked row-pool weights of NT cutouts
    # wxt_ref : (1, NT, W, cs)     per-cutout column-pool weights, transposed
    # o_ref   : (1, 1, NT*cs, cs)  output slab for this (b, c, group)
    compute_dtype = x_ref.dtype

    # GEMM 1: row (H) pooling for all NT cutouts of this group at once.
    #   (NT*cs, H) @ (H, W) -> (NT*cs, W); bf16 inputs, f32 MXU accumulation.
    #   N = W keeps the MXU lane dimension full at real image sizes.
    u = jnp.dot(wy_ref[0], x_ref[0, 0], preferred_element_type=jnp.float32)

    # Round the intermediate back to the compute dtype so GEMM 2 also runs on
    # the bf16 MXU path, then split the sublane dim (NT*cs) -> (NT, cs).  The
    # lane dim (W) is untouched, so the reshape is layout-preserving.
    u = u.astype(compute_dtype).reshape(nt, cs, -1)

    # GEMM 2: column (W) pooling, batched over the NT cutouts.  No broadcast
    # of Wy across channels anywhere (channels live on the grid).
    out = lax.dot_general(
        u, wxt_ref[0],
        dimension_numbers=(((2,), (1,)), ((0,), (0,))),
        preferred_element_type=jnp.float32)              # (NT, cs, cs)

    # Single slab store; merging (NT, cs) into the sublane dim keeps the lane
    # dim (cs) unchanged.
    o_ref[0, 0] = out.reshape(nt * cs, cs).astype(o_ref.dtype)


# ----------------------------------------------------------------------------
# Jitted forward: weight build + layout prep + pallas_call + output reorder.
# ----------------------------------------------------------------------------
@functools.partial(jax.jit,
                   static_argnames=("cut_size", "nt", "cutn", "compute_dtype"))
def _make_cutouts(x, sizes, offx, offy, *, cut_size, nt, cutn, compute_dtype):
    B, C, H, W = x.shape
    cs = cut_size
    n_pad = sizes.shape[0]            # padded to a multiple of nt
    g = n_pad // nt
    out_dtype = x.dtype

    # Pooling weights built on device (f32), then laid out per cutout group.
    wy = _pool_weights(H, sizes, offy, cs)                        # (n_pad, cs, H)
    wx = _pool_weights(W, sizes, offx, cs)                        # (n_pad, cs, W)
    wy_g = wy.reshape(g, nt * cs, H).astype(compute_dtype)        # (G, NT*cs, H)
    wxt_g = jnp.swapaxes(wx.reshape(g, nt, cs, W), -1, -2)        # (G, NT, W, cs)
    wxt_g = wxt_g.astype(compute_dtype)
    xc = x.astype(compute_dtype)

    itm_c = np.dtype(compute_dtype).itemsize
    itm_o = np.dtype(out_dtype).itemsize

    # Advisory cost estimate so XLA schedules the custom call sensibly.
    flops = 2 * B * C * g * (nt * cs * H * W + nt * cs * cs * W)
    bytes_accessed = (B * C * H * W * itm_c                       # image (read once)
                      + B * C * g * nt * cs * (H + W) * itm_c     # weights
                      + B * C * n_pad * cs * cs * itm_o)          # output

    # VMEM budget: double-buffered blocks + f32 intermediate + headroom.
    # Raised above the 16/32 MiB scoped defaults (helps v5e/v6e for medium
    # images) and capped below v7x's 64 MiB physical VMEM.
    blk_bytes = (H * W * itm_c + nt * cs * H * itm_c + nt * W * cs * itm_c
                 + nt * cs * cs * itm_o)
    need = 2 * blk_bytes + 6 * nt * cs * W * 4
    vmem_limit = int(min(max(need + (8 << 20), 32 << 20), 56 << 20))

    kernel = functools.partial(_cutout_kernel, nt=nt, cs=cs)
    out = pl.pallas_call(
        kernel,
        out_shape=jax.ShapeDtypeStruct((B, C, n_pad * cs, cs), out_dtype),
        # Cutout-group axis innermost: the image block index depends only on
        # (b, c), so each channel stays VMEM-resident across all groups and is
        # DMA'd from HBM exactly once per batch element.
        grid=(B, C, g),
        in_specs=[
            pl.BlockSpec((1, 1, H, W), lambda b, c, k: (b, c, 0, 0)),
            pl.BlockSpec((1, nt * cs, H), lambda b, c, k: (k, 0, 0)),
            pl.BlockSpec((1, nt, W, cs), lambda b, c, k: (k, 0, 0, 0)),
        ],
        out_specs=pl.BlockSpec((1, 1, nt * cs, cs),
                               lambda b, c, k: (b, c, k, 0)),
        compiler_params=pltpu.CompilerParams(
            # Every grid point writes a disjoint output block, so all axes are
            # parallel; on v7x (2 TCs) both cores stay busy even when B == 1.
            dimension_semantics=("parallel", "parallel", "parallel"),
            vmem_limit_bytes=vmem_limit),
        cost_estimate=pl.CostEstimate(flops=flops, transcendentals=0,
                                      bytes_accessed=bytes_accessed),
    )(xc, wy_g, wxt_g)

    # (B, C, n_pad*cs, cs) -> torch.cat order (cutout-major): (cutn*B, C, cs, cs)
    out = out.reshape(B, C, n_pad, cs, cs)
    out = jnp.transpose(out, (2, 0, 1, 3, 4))[:cutn]
    out = out.reshape(cutn * B, C, cs, cs)
    return out, (wy[:cutn], wx[:cutn])


class MakeCutoutsPallas:
    """Pallas-TPU port of MakeCutouts.forward."""

    def __init__(self, cut_size, cutn, cut_pow=1.0,
                 compute_dtype=jnp.bfloat16, cutouts_per_step=None):
        self.cut_size = int(cut_size)
        self.cutn = int(cutn)
        self.cut_pow = float(cut_pow)
        # bf16 by default: fast MXU path + half the HBM/VMEM traffic for the
        # image; accumulation stays f32 and the OUTPUT keeps x.dtype.
        self.compute_dtype = compute_dtype
        if cutouts_per_step is None:
            # Enough cutouts per grid step to give GEMM 1 a deep M dimension
            # (~256 rows) and amortize per-step overhead, without blowing up
            # the per-step VMEM blocks.  (Can be raised on v5e/v6e: 128 MiB.)
            cutouts_per_step = max(1, min(self.cutn,
                                          256 // max(1, self.cut_size)))
        self.nt = int(cutouts_per_step)

    def __call__(self, x, seed=0):
        B, C, H, W = x.shape
        rng = np.random.default_rng(seed)
        sizes, offx, offy = _sample_cutout_params(
            rng, H, W, self.cut_size, self.cutn, self.cut_pow)
        # Pad the cutout count to a multiple of the per-step group size; the
        # padded cutouts are computed and dropped (keeps all shapes static).
        n_pad = -(-self.cutn // self.nt) * self.nt
        pad = n_pad - self.cutn
        if pad:
            sizes = np.concatenate([sizes, np.repeat(sizes[-1:], pad)])
            offx = np.concatenate([offx, np.repeat(offx[-1:], pad)])
            offy = np.concatenate([offy, np.repeat(offy[-1:], pad)])
        sizes = jnp.asarray(sizes, jnp.int32)
        offx = jnp.asarray(offx, jnp.int32)
        offy = jnp.asarray(offy, jnp.int32)
        return _make_cutouts(x, sizes, offx, offy,
                             cut_size=self.cut_size, nt=self.nt,
                             cutn=self.cutn, compute_dtype=self.compute_dtype)


if __name__ == "__main__":
    B, C, H, W = 2, 4, 16, 16
    cut_size, cutn, cut_pow = 8, 4, 1.0

    x = jax.random.normal(jax.random.PRNGKey(0), (B, C, H, W),
                          dtype=jnp.float32)

    def reference(wy, wx):
        # Pure-JAX f32 reference of the same crop + adaptive-pool-as-matmul.
        ref = jnp.einsum("niy,bcyx,njx->nbcij", wy, x, wx,
                         precision=lax.Precision.HIGHEST)
        return ref.reshape(-1, C, cut_size, cut_size)

    # 1) f32 compute path: tight check of crop + adaptive_avg_pool2d semantics.
    mod_f32 = MakeCutoutsPallas(cut_size, cutn, cut_pow,
                                compute_dtype=jnp.float32)
    out_f32, (wy, wx) = mod_f32(x, seed=0)
    out_f32 = jax.block_until_ready(out_f32)
    assert out_f32.shape == (cutn * B, C, cut_size, cut_size), out_f32.shape
    np.testing.assert_allclose(np.asarray(out_f32),
                               np.asarray(reference(wy, wx)),
                               rtol=1e-5, atol=1e-5)

    # 2) Default bf16 compute path (fast MXU path); output stays float32.
    mod_bf16 = MakeCutoutsPallas(cut_size, cutn, cut_pow)
    out_bf16, (wy2, wx2) = mod_bf16(x, seed=0)
    out_bf16 = jax.block_until_ready(out_bf16)
    assert out_bf16.dtype == x.dtype
    np.testing.assert_allclose(np.asarray(out_bf16),
                               np.asarray(reference(wy2, wx2)),
                               rtol=5e-2, atol=5e-2)

    # 3) Multi-group path (cutn not a multiple of the per-step group size):
    #    exercises the cutout-group tiling + padding logic.
    mod_grp = MakeCutoutsPallas(cut_size, 5, cut_pow,
                                compute_dtype=jnp.float32, cutouts_per_step=2)
    out_grp, (wy3, wx3) = mod_grp(x, seed=1)
    out_grp = jax.block_until_ready(out_grp)
    assert out_grp.shape == (5 * B, C, cut_size, cut_size), out_grp.shape
    np.testing.assert_allclose(np.asarray(out_grp),
                               np.asarray(reference(wy3, wx3)),
                               rtol=1e-5, atol=1e-5)

    print("KERNEL_OK")
</pallas_src>

<mosaic_0001>
module attributes {stable_mosaic.version = 11 : i64} {
  func.func @_cutout_kernel(%arg0: i32, %arg1: i32, %arg2: i32, %arg3: memref<1x1x16x16xf32, #tpu.memory_space<vmem>>, %arg4: memref<1x32x16xf32, #tpu.memory_space<vmem>>, %arg5: memref<1x4x16x8xf32, #tpu.memory_space<vmem>>, %arg6: memref<1x1x32x8xf32, #tpu.memory_space<vmem>>) attributes {dimension_semantics = [#tpu.dimension_semantics<parallel>, #tpu.dimension_semantics<parallel>, #tpu.dimension_semantics<parallel>], iteration_bounds = array<i64: 2, 4, 1>, scalar_prefetch = 0 : i64, scratch_operands = 0 : i64, tpu.core_type = #tpu.core_type<tc>, window_params = [{transform_indices = @transform_0, window_bounds = array<i64: 1, 1, 16, 16>}, {transform_indices = @transform_1, window_bounds = array<i64: 1, 32, 16>}, {transform_indices = @transform_2, window_bounds = array<i64: 1, 4, 16, 8>}, {transform_indices = @transform_3, window_bounds = array<i64: 1, 1, 32, 8>}]} {
    %c0 = arith.constant 0 : index
    %c0_0 = arith.constant 0 : index
    %c0_1 = arith.constant 0 : index
    %0 = vector.load %arg4[%c0, %c0_0, %c0_1] : memref<1x32x16xf32, #tpu.memory_space<vmem>>, vector<1x32x16xf32>
    %1 = vector.shape_cast %0 : vector<1x32x16xf32> to vector<32x16xf32>
    %c0_2 = arith.constant 0 : index
    %c0_3 = arith.constant 0 : index
    %c0_4 = arith.constant 0 : index
    %c0_5 = arith.constant 0 : index
    %2 = vector.load %arg3[%c0_2, %c0_3, %c0_4, %c0_5] : memref<1x1x16x16xf32, #tpu.memory_space<vmem>>, vector<1x1x16x16xf32>
    %3 = vector.shape_cast %2 : vector<1x1x16x16xf32> to vector<16x16xf32>
    %cst = arith.constant dense<0.000000e+00> : vector<32x16xf32>
    %4 = tpu.matmul %1, %3, %cst {dimension_numbers = #tpu.dot_dimension_numbers<[1], [0], [0], [1], [0, 0, 1, 1], [], []>} : vector<32x16xf32>, vector<16x16xf32>, vector<32x16xf32> -> vector<32x16xf32>
    %5 = vector.shape_cast %4 : vector<32x16xf32> to vector<4x8x16xf32>
    %c0_6 = arith.constant 0 : index
    %c0_7 = arith.constant 0 : index
    %c0_8 = arith.constant 0 : index
    %c0_9 = arith.constant 0 : index
    %6 = vector.load %arg5[%c0_6, %c0_7, %c0_8, %c0_9] : memref<1x4x16x8xf32, #tpu.memory_space<vmem>>, vector<1x4x16x8xf32>
    %7 = vector.shape_cast %6 : vector<1x4x16x8xf32> to vector<4x16x8xf32>
    %cst_10 = arith.constant dense<0.000000e+00> : vector<4x8x8xf32>
    %8 = tpu.matmul %5, %7, %cst_10 {dimension_numbers = #tpu.dot_dimension_numbers<[2], [1], [1], [2], [0, 0, 0, 1, 1, 2], [0], [0]>} : vector<4x8x16xf32>, vector<4x16x8xf32>, vector<4x8x8xf32> -> vector<4x8x8xf32>
    %9 = vector.shape_cast %8 : vector<4x8x8xf32> to vector<32x8xf32>
    %c0_11 = arith.constant 0 : index
    %c0_12 = arith.constant 0 : index
    %c0_13 = arith.constant 0 : index
    %c0_14 = arith.constant 0 : index
    %10 = vector.load %arg6[%c0_11, %c0_12, %c0_13, %c0_14] : memref<1x1x32x8xf32, #tpu.memory_space<vmem>>, vector<1x1x32x8xf32>
    %11 = vector.shape_cast %10 : vector<1x1x32x8xf32> to vector<32x8xf32>
    %12 = vector.shape_cast %9 : vector<32x8xf32> to vector<1x1x32x8xf32>
    tpu.vector_store %arg6[%c0_11, %c0_12, %c0_13, %c0_14], %12 {strides = array<i32>} : memref<1x1x32x8xf32, #tpu.memory_space<vmem>>, vector<1x1x32x8xf32>,
    return
  }
  func.func @transform_0(%arg0: i32, %arg1: i32, %arg2: i32) -> (i32, i32, i32, i32) {
    %c0_i32 = arith.constant 0 : i32
    %c0_i32_0 = arith.constant 0 : i32
    %c0_i32_1 = arith.constant 0 : i32
    return %arg0, %arg1, %c0_i32, %c0_i32_0 : i32, i32, i32, i32
  }
  func.func @transform_1(%arg0: i32, %arg1: i32, %arg2: i32) -> (i32, i32, i32) {
    %c0_i32 = arith.constant 0 : i32
    %c0_i32_0 = arith.constant 0 : i32
    %c0_i32_1 = arith.constant 0 : i32
    return %arg2, %c0_i32, %c0_i32_0 : i32, i32, i32
  }
  func.func @transform_2(%arg0: i32, %arg1: i32, %arg2: i32) -> (i32, i32, i32, i32) {
    %c0_i32 = arith.constant 0 : i32
    %c0_i32_0 = arith.constant 0 : i32
    %c0_i32_1 = arith.constant 0 : i32
    %c0_i32_2 = arith.constant 0 : i32
    return %arg2, %c0_i32, %c0_i32_0, %c0_i32_1 : i32, i32, i32, i32
  }
  func.func @transform_3(%arg0: i32, %arg1: i32, %arg2: i32) -> (i32, i32, i32, i32) {
    %c0_i32 = arith.constant 0 : i32
    %c0_i32_0 = arith.constant 0 : i32
    return %arg0, %arg1, %arg2, %c0_i32 : i32, i32, i32, i32
  }
}

</mosaic_0001>

<llo_original>
// kernel: _make_cutouts.1
$region0: #{_make_cutouts.1}
  #allocation0 [shape = 'u32[]', space=smem, size = 0x4, offset = 0x4, fixed_abs, tag = 'smem constant byte address 0x4 - core index']
  #allocation1 [shape = 'u32[144,128]{1,0:T(1,128)}', space=vmem, size = 0x12000, scoped, tag = 'internal scratch']
  %s0 = inlined_call_operand.vmem [shape: f32[2,4,16,16], index: 0, kind: input, shape index: {}]
  %s1 = inlined_call_operand.vmem [shape: f32[1,32,16], index: 1, kind: input, shape index: {}]
  %s2 = inlined_call_operand.vmem [shape: f32[1,4,16,8], index: 2, kind: input, shape index: {}]
  %s3 = inlined_call_operand.vmem [shape: f32[2,4,32,8], index: 3, kind: output, shape index: {}]
  %s4 = sld [smem:[#allocation0]]
  $region45: #{_make_cutouts.1} parent=0
    _
  %s6 = ssub.s32 1, %s4
  %s7 = scalar_select 0, %s6, %s4
  loop: start=0, step=1, limit=10
  $region2: #{_make_cutouts.1} parent=0 // loop_pre_header
    _
  $region3: #{_make_cutouts.1} parent=0 // loop_header
    %s9 = sphi 0, %s13
    %p10 = scmp.ge.s32.totalorder %s9, 10
    %s16 = sphi 0, %s35
    %s17 = sphi 0, %s31
    %s18 = sphi 0, %s27
    %s19 = sphi 0, %s16
    %s20 = sphi 0, %s17
    %s21 = sphi 0, %s18
    %s22 = sphi 0, %s19
    %s23 = sphi 0, %s20
    %s24 = sphi 0, %s21
    %s40 = sphi 0, %s42
    %s43 = sphi 0, %s40
    %s44 = sphi 0, %s43
    %s60 = sphi 0, %s44
    %s66 = sphi 0, %s68
    %s69 = sphi 0, %s66
    %s70 = sphi 0, %s69
    %s86 = sphi 0, %s70
    %s92 = sphi 0, %s94
    %s95 = sphi 0, %s92
    %s96 = sphi 0, %s95
    %s112 = sphi 0, %s96
    %s122 = sphi 0, %s124
    %s125 = sphi 0, %s122
    %s126 = sphi 0, %s125
    %s142 = sphi 0, %s126
  $region4: #{_make_cutouts.1} parent=0 // loop_header_branch
    %12 = sbr.rel (%p10) target = $region8
  $region5: #{_make_cutouts.1} parent=0 // loop_body
    %s14 = ssub.s32 %s9, 1
    %s15 = ssub.s32 %s9, 2
    %s25 = sadd.s32 1, %s18
    %p26 = scmp.ge.s32.totalorder %s25, 1
    %s27 = scalar_select %p26, 0, %s25
    %s28 = sadd.s32 1, %s17
    %s29 = scalar_select %p26, %s28, %s17
    %p30 = scmp.ge.s32.totalorder %s29, 4
    %s31 = scalar_select %p30, 0, %s29
    %s32 = sadd.s32 1, %s16
    %s33 = scalar_select %p30, %s32, %s16
    %p34 = scmp.ge.s32.totalorder %s33, 2
    %s35 = scalar_select %p34, 0, %s33
    %s36 = ssub.s32 %s16, %s35
    %s37 = ssub.s32 %s17, %s31
    %s38 = sor.u32 %s36, %s37
    %p39 = scmp.eq.s32.totalorder %s38, 0
    %s41 = sadd.s32 %s40, 1
    %s42 = scalar_select %p39, %s40, %s41
    %p45 = pneg %p39
    %p46 = scmp.eq.s32.totalorder %s9, 7
    %p47 = por %p45, %p46
    %p48 = scmp.ne.s32.totalorder %s40, %s43
    %p49 = scmp.eq.s32.totalorder %s9, 0
    %p50 = por %p48, %p49
    %p51 = scmp.ne.s32.totalorder %s40, %s43
    %p52 = scmp.eq.s32.totalorder %s14, 7
    %p53 = por %p51, %p52
    %p54 = scmp.ne.s32.totalorder %s43, %s44
    %p55 = scmp.eq.s32.totalorder %s14, 0
    %p56 = por %p54, %p55
    %p57 = scmp.ne.s32.totalorder %s43, %s44
    %p58 = scmp.eq.s32.totalorder %s15, 7
    %p59 = por %p57, %p58
    %p61 = scmp.ne.s32.totalorder %s44, %s60
    %p62 = scmp.eq.s32.totalorder %s15, 0
    %p63 = por %p61, %p62
    %s64 = ssub.s32 %s18, %s27
    %p65 = scmp.eq.s32.totalorder %s64, 0
    %s67 = sadd.s32 %s66, 1
    %s68 = scalar_select %p65, %s66, %s67
    %p71 = pneg %p65
    %p72 = scmp.eq.s32.totalorder %s9, 7
    %p73 = por %p71, %p72
    %p74 = scmp.ne.s32.totalorder %s66, %s69
    %p75 = scmp.eq.s32.totalorder %s9, 0
    %p76 = por %p74, %p75
    %p77 = scmp.ne.s32.totalorder %s66, %s69
    %p78 = scmp.eq.s32.totalorder %s14, 7
    %p79 = por %p77, %p78
    %p80 = scmp.ne.s32.totalorder %s69, %s70
    %p81 = scmp.eq.s32.totalorder %s14, 0
    %p82 = por %p80, %p81
    %p83 = scmp.ne.s32.totalorder %s69, %s70
    %p84 = scmp.eq.s32.totalorder %s15, 7
    %p85 = por %p83, %p84
    %p87 = scmp.ne.s32.totalorder %s70, %s86
    %p88 = scmp.eq.s32.totalorder %s15, 0
    %p89 = por %p87, %p88
    %s90 = ssub.s32 %s18, %s27
    %p91 = scmp.eq.s32.totalorder %s90, 0
    %s93 = sadd.s32 %s92, 1
    %s94 = scalar_select %p91, %s92, %s93
    %p97 = pneg %p91
    %p98 = scmp.eq.s32.totalorder %s9, 7
    %p99 = por %p97, %p98
    %p100 = scmp.ne.s32.totalorder %s92, %s95
    %p101 = scmp.eq.s32.totalorder %s9, 0
    %p102 = por %p100, %p101
    %p103 = scmp.ne.s32.totalorder %s92, %s95
    %p104 = scmp.eq.s32.totalorder %s14, 7
    %p105 = por %p103, %p104
    %p106 = scmp.ne.s32.totalorder %s95, %s96
    %p107 = scmp.eq.s32.totalorder %s14, 0
    %p108 = por %p106, %p107
    %p109 = scmp.ne.s32.totalorder %s95, %s96
    %p110 = scmp.eq.s32.totalorder %s15, 7
    %p111 = por %p109, %p110
    %p113 = scmp.ne.s32.totalorder %s96, %s112
    %p114 = scmp.eq.s32.totalorder %s15, 0
    %p115 = por %p113, %p114
    %s116 = ssub.s32 %s16, %s35
    %s117 = ssub.s32 %s17, %s31
    %s118 = sor.u32 %s116, %s117
    %s119 = ssub.s32 %s18, %s27
    %s120 = sor.u32 %s118, %s119
    %p121 = scmp.eq.s32.totalorder %s120, 0
    %s123 = sadd.s32 %s122, 1
    %s124 = scalar_select %p121, %s122, %s123
    %p127 = pneg %p121
    %p128 = scmp.eq.s32.totalorder %s9, 7
    %p129 = por %p127, %p128
    %p130 = scmp.ne.s32.totalorder %s122, %s125
    %p131 = scmp.eq.s32.totalorder %s9, 0
    %p132 = por %p130, %p131
    %p133 = scmp.ne.s32.totalorder %s122, %s125
    %p134 = scmp.eq.s32.totalorder %s14, 7
    %p135 = por %p133, %p134
    %p136 = scmp.ne.s32.totalorder %s125, %s126
    %p137 = scmp.eq.s32.totalorder %s14, 0
    %p138 = por %p136, %p137
    %p139 = scmp.ne.s32.totalorder %s125, %s126
    %p140 = scmp.eq.s32.totalorder %s15, 7
    %p141 = por %p139, %p140
    %p143 = scmp.ne.s32.totalorder %s126, %s142
    %p144 = scmp.eq.s32.totalorder %s15, 0
    %p145 = por %p143, %p144
    %p146 = scmp.le.s32.totalorder 1, %s9
    %p147 = scmp.lt.s32.totalorder %s9, 9
    %p148 = pnand %p146, %p147
    %p149 = pneg %p148
    // Predicated region
    $region9: #{_make_cutouts.1} parent=5 // pred_check
      _
    $region10: #{_make_cutouts.1} parent=5 // pred_check_branch
      %151 = sbr.rel (%p148) target = $region12
    $region11: #{_make_cutouts.1} parent=5 // pred_region
      %s152 = ssub.s32 %s9, 1
      // Predicated region
      $region13: #{_make_cutouts.1} parent=11 // pred_check
        %p153 = pneg %p82
      $region14: #{_make_cutouts.1} parent=11 // pred_check_branch
        %155 = sbr.rel (%p153) target = $region16
      $region15: #{_make_cutouts.1} parent=11 // pred_region
        %p156 = scmp.lt.s32.totalorder %s21, 0
        %s157 = scalar_select %p156, %s21, 0
        %s158 = smul.addr %s157, 4
        %s159 = smul.addr %s158, 8
        %s160 = scalar_lea.vmem %s1, %s159
      $region16: #{_make_cutouts.1} parent=11 // pred_fallthru
        _
      // Predicated region
      $region17: #{_make_cutouts.1} parent=11 // pred_check
        %p161 = pneg %p108
      $region18: #{_make_cutouts.1} parent=11 // pred_check_branch
        %163 = sbr.rel (%p161) target = $region20
      $region19: #{_make_cutouts.1} parent=11 // pred_region
        %p164 = scmp.lt.s32.totalorder %s21, 0
        %s165 = scalar_select %p164, %s21, 0
        %s166 = smul.addr %s165, 8
        %s167 = smul.addr %s166, 8
        %s168 = scalar_lea.vmem %s2, %s167
      $region20: #{_make_cutouts.1} parent=11 // pred_fallthru
        _
    $region12: #{_make_cutouts.1} parent=5 // pred_fallthru
      _
    %p169 = scmp.lt.s32.totalorder %s9, 8
    // Predicated region
    $region21: #{_make_cutouts.1} parent=5 // pred_check
      %p170 = pneg %p169
    $region22: #{_make_cutouts.1} parent=5 // pred_check_branch
      %172 = sbr.rel (%p170) target = $region24
    $region23: #{_make_cutouts.1} parent=5 // pred_region
      // Predicated region
      $region25: #{_make_cutouts.1} parent=23 // pred_check
        %p173 = pneg %p50
      $region26: #{_make_cutouts.1} parent=23 // pred_check_branch
        %175 = sbr.rel (%p173) target = $region28
      $region27: #{_make_cutouts.1} parent=23 // pred_region
        %p176 = scmp.lt.s32.totalorder %s16, 1
        %s177 = scalar_select %p176, %s16, 1
        %p178 = scmp.lt.s32.totalorder %s17, 3
        %s179 = scalar_select %p178, %s17, 3
        %s180 = smul.addr %s179, 2
        %s181 = smul.addr %s177, 8
        %s182 = sadd.s32 %s180, %s181
        %s183 = smul.addr %s182, 8
        %s184 = scalar_lea.vmem %s0, %s183
      $region28: #{_make_cutouts.1} parent=23 // pred_fallthru
        _
    $region24: #{_make_cutouts.1} parent=5 // pred_fallthru
      _
    %p185 = scmp.le.s32.totalorder 1, %s9
    %p186 = scmp.lt.s32.totalorder %s9, 9
    %p187 = pnand %p185, %p186
    %p188 = pneg %p187
    // Predicated region
    $region29: #{_make_cutouts.1} parent=5 // pred_check
      _
    $region30: #{_make_cutouts.1} parent=5 // pred_check_branch
      %190 = sbr.rel (%p187) target = $region32
    $region31: #{_make_cutouts.1} parent=5 // pred_region
      %s191 = ssub.s32 %s9, 1
      %p192 = scmp.lt.s32.totalorder %s19, 1
      %s193 = scalar_select %p192, %s19, 1
      %p194 = scmp.lt.s32.totalorder %s20, 3
      %s195 = scalar_select %p194, %s20, 3
      %s196 = smul.addr %s195, 2
      %s197 = smul.addr %s193, 8
      %s198 = sadd.s32 %s196, %s197
      %s199 = smul.addr %s198, 8
      %s200 = scalar_lea.vmem %s0, %s199
      %p201 = pneg %p56
      %p202 = pneg %p53
      %p203 = scmp.lt.s32.totalorder %s21, 0
      %s204 = scalar_select %p203, %s21, 0
      %s205 = smul.addr %s204, 4
      %s206 = smul.addr %s205, 8
      %s207 = scalar_lea.vmem %s1, %s206
      %p208 = pneg %p82
      %p209 = pneg %p79
      %p210 = scmp.lt.s32.totalorder %s21, 0
      %s211 = scalar_select %p210, %s21, 0
      %s212 = smul.addr %s211, 8
      %s213 = smul.addr %s212, 8
      %s214 = scalar_lea.vmem %s2, %s213
      %p215 = pneg %p108
      %p216 = pneg %p105
      %p217 = pneg %p138
      %p218 = pneg %p135
      %s219 = smul.u32 4, %s21
      %p220 = scmp.lt.s32.totalorder %s19, 1
      %s221 = scalar_select %p220, %s19, 1
      %p222 = scmp.lt.s32.totalorder %s20, 3
      %s223 = scalar_select %p222, %s20, 3
      %p224 = scmp.lt.s32.totalorder %s219, 3
      %s225 = scalar_select %p224, %s219, 3
      %s226 = smul.addr %s223, 4
      %s227 = sadd.s32 %s225, %s226
      %s228 = smul.addr %s221, 16
      %s229 = sadd.s32 %s227, %s228
      %s230 = smul.addr %s229, 8
      %s231 = scalar_lea.vmem %s3, %s230
      %p232 = scmp.lt.s32.totalorder %s19, 1
      %s233 = scalar_select %p232, %s19, 1
      %p234 = scmp.lt.s32.totalorder %s20, 3
      %s235 = scalar_select %p234, %s20, 3
      %s236 = smul.addr %s235, 2
      %s237 = smul.addr %s233, 8
      %s238 = sadd.s32 %s236, %s237
      %s239 = smul.addr %s238, 8
      %s240 = scalar_lea.vmem %s0, %s239
      %p241 = scmp.lt.s32.totalorder %s21, 0
      %s242 = scalar_select %p241, %s21, 0
      %s243 = smul.addr %s242, 4
      %s244 = smul.addr %s243, 8
      %s245 = scalar_lea.vmem %s1, %s244
      %p246 = scmp.lt.s32.totalorder %s21, 0
      %s247 = scalar_select %p246, %s21, 0
      %s248 = smul.addr %s247, 8
      %s249 = smul.addr %s248, 8
      %s250 = scalar_lea.vmem %s2, %s249
      %s251 = smul.u32 4, %s21
      %p252 = scmp.lt.s32.totalorder %s19, 1
      %s253 = scalar_select %p252, %s19, 1
      %p254 = scmp.lt.s32.totalorder %s20, 3
      %s255 = scalar_select %p254, %s20, 3
      %p256 = scmp.lt.s32.totalorder %s251, 3
      %s257 = scalar_select %p256, %s251, 3
      %s258 = smul.addr %s255, 4
      %s259 = sadd.s32 %s257, %s258
      %s260 = smul.addr %s253, 16
      %s261 = sadd.s32 %s259, %s260
      %s262 = smul.addr %s261, 8
      %s263 = scalar_lea.vmem %s3, %s262
      %s264 = smul.u32 4, %s21
      %v265 = vld [vmem:[%s245] sm:$0xff]
      %v266 = vld [vmem:[%s245 + $0x8] sm:$0xff]
      %v267 = vld [vmem:[%s245 + $0x10] sm:$0xff]
      %v268 = vld [vmem:[%s245 + $0x18] sm:$0xff]
      %v269 = vld [vmem:[%s240] sm:$0xff]
      %v270 = vld [vmem:[%s240 + $0x8] sm:$0xff]
      %vm271 = vcmask 130048
      %v273 = vsel %vm271, %v265, 0
      %v276 = vsel %vm271, %v266, 0
      %v279 = vsel %vm271, %v267, 0
      %v282 = vsel %vm271, %v268, 0
      %284 = vmatprep.subr.mxu0 0.0
      %285 = vmatpush1.msra.mxu0 %v269
      %286 = vmatprep.subr.mxu0 0.0
      %287 = vmatpush1.msra.mxu0 %v270
      %288 = vmatprep.subr.mxu0 0.0
      %289 = vmatpush1.msra.mxu0 0.0
      %290 = vmatprep.subr.mxu0 0.0
      %291 = vmatpush1.msra.mxu0 0.0
      %292 = vmatprep.subr.mxu0 0.0
      %293 = vmatpush1.msra.mxu0 0.0
      %294 = vmatprep.subr.mxu0 0.0
      %295 = vmatpush1.msra.mxu0 0.0
      %296 = vmatprep.subr.mxu0 0.0
      %297 = vmatpush1.msra.mxu0 0.0
      %298 = vmatprep.subr.mxu0 0.0
      %299 = vmatpush1.msra.mxu0 0.0
      %300 = vmatprep.subr.mxu0 0.0
      %301 = vmatpush1.msra.mxu0 0.0
      %302 = vmatprep.subr.mxu0 0.0
      %303 = vmatpush1.msra.mxu0 0.0
      %304 = vmatprep.subr.mxu0 0.0
      %305 = vmatpush1.msra.mxu0 0.0
      %306 = vmatprep.subr.mxu0 0.0
      %307 = vmatpush1.msra.mxu0 0.0
      %308 = vmatprep.subr.mxu0 0.0
      %309 = vmatpush1.msra.mxu0 0.0
      %310 = vmatprep.subr.mxu0 0.0
      %311 = vmatpush1.msra.mxu0 0.0
      %312 = vmatprep.subr.mxu0 0.0
      %313 = vmatpush1.msra.mxu0 0.0
      %314 = vmatprep.subr.mxu0 0.0
      %315 = vmatpush1.msra.mxu0 0.0
      %316 = vmatprep.subr.mxu0 0.0
      %317 = vmatpush1.msra.mxu0 0.0
      %318 = vmatprep.subr.mxu0 0.0
      %319 = vmatpush1.msra.mxu0 0.0
      %320 = vmatprep.subr.mxu0 0.0
      %321 = vmatpush1.msra.mxu0 0.0
      %322 = vmatprep.subr.mxu0 0.0
      %323 = vmatpush1.msra.mxu0 0.0
      %324 = vmatprep.subr.mxu0 0.0
      %325 = vmatpush1.msra.mxu0 0.0
      %326 = vmatprep.subr.mxu0 0.0
      %327 = vmatpush1.msra.mxu0 0.0
      %328 = vmatprep.subr.mxu0 0.0
      %329 = vmatpush1.msra.mxu0 0.0
      %330 = vmatprep.subr.mxu0 0.0
      %331 = vmatpush1.msra.mxu0 0.0
      %332 = vmatprep.subr.mxu0 0.0
      %333 = vmatpush1.msra.mxu0 0.0
      %334 = vmatprep.subr.mxu0 0.0
      %335 = vmatpush1.msra.mxu0 0.0
      %336 = vmatprep.subr.mxu0 0.0
      %337 = vmatpush1.msra.mxu0 0.0
      %338 = vmatprep.subr.mxu0 0.0
      %339 = vmatpush1.msra.mxu0 0.0
      %340 = vmatprep.subr.mxu0 0.0
      %341 = vmatpush1.msra.mxu0 0.0
      %342 = vmatprep.subr.mxu0 0.0
      %343 = vmatpush1.msra.mxu0 0.0
      %344 = vmatprep.subr.mxu0 0.0
      %345 = vmatpush1.msra.mxu0 0.0
      %346 = vmatprep.subr.mxu0 0.0
      %347 = vmatpush1.msra.mxu0 0.0
      %348 = vmatprep.mubr.f32.mxu0 0.0
      %349 = vmatmul.mubr.f32.gmra.mrb[0].mxu0 %v273
      %v350 = vpop.f32.mrb[0].mxu0
      %v351 = vadd.f32 0.0, %v350
      %v352 = vpop.f32.mrb[0].mxu0
      %353 = vmatprep.mubr.f32.mxu0 0.0
      %354 = vmatmul.mubr.f32.gmra.mrb[0].mxu0 %v276
      %v355 = vpop.f32.mrb[0].mxu0
      %v356 = vadd.f32 0.0, %v355
      %v357 = vpop.f32.mrb[0].mxu0
      %358 = vmatprep.mubr.f32.mxu0 0.0
      %359 = vmatmul.mubr.f32.gmra.mrb[0].mxu0 %v279
      %v360 = vpop.f32.mrb[0].mxu0
      %v361 = vadd.f32 0.0, %v360
      %v362 = vpop.f32.mrb[0].mxu0
      %363 = vmatprep.mubr.f32.mxu0 0.0
      %364 = vmatmul.mubr.f32.gmra.mrb[0].mxu0 %v282
      %v365 = vpop.f32.mrb[0].mxu0
      %v366 = vadd.f32 0.0, %v365
      %v367 = vpop.f32.mrb[0].mxu0
      %368 = vdwg.mxu0
      %v369 = vld [vmem:[%s250] sm:$0xff]
      %v370 = vld [vmem:[%s250 + $0x8] sm:$0xff]
      %v371 = vld [vmem:[%s250 + $0x10] sm:$0xff]
      %v372 = vld [vmem:[%s250 + $0x18] sm:$0xff]
      %v373 = vld [vmem:[%s250 + $0x20] sm:$0xff]
      %v374 = vld [vmem:[%s250 + $0x28] sm:$0xff]
      %v375 = vld [vmem:[%s250 + $0x30] sm:$0xff]
      %v376 = vld [vmem:[%s250 + $0x38] sm:$0xff]
      %v378 = vsel %vm271, %v351, 0
      %380 = vmatprep.subr.mxu0 0.0
      %381 = vmatpush1.msra.mxu0 %v369
      %382 = vmatprep.subr.mxu0 0.0
      %383 = vmatpush1.msra.mxu0 %v370
      %384 = vmatprep.subr.mxu0 0.0
      %385 = vmatpush1.msra.mxu0 0.0
      %386 = vmatprep.subr.mxu0 0.0
      %387 = vmatpush1.msra.mxu0 0.0
      %388 = vmatprep.subr.mxu0 0.0
      %389 = vmatpush1.msra.mxu0 0.0
      %390 = vmatprep.subr.mxu0 0.0
      %391 = vmatpush1.msra.mxu0 0.0
      %392 = vmatprep.subr.mxu0 0.0
      %393 = vmatpush1.msra.mxu0 0.0
      %394 = vmatprep.subr.mxu0 0.0
      %395 = vmatpush1.msra.mxu0 0.0
      %396 = vmatprep.subr.mxu0 0.0
      %397 = vmatpush1.msra.mxu0 0.0
      %398 = vmatprep.subr.mxu0 0.0
      %399 = vmatpush1.msra.mxu0 0.0
      %400 = vmatprep.subr.mxu0 0.0
      %401 = vmatpush1.msra.mxu0 0.0
      %402 = vmatprep.subr.mxu0 0.0
      %403 = vmatpush1.msra.mxu0 0.0
      %404 = vmatprep.subr.mxu0 0.0
      %405 = vmatpush1.msra.mxu0 0.0
      %406 = vmatprep.subr.mxu0 0.0
      %407 = vmatpush1.msra.mxu0 0.0
      %408 = vmatprep.subr.mxu0 0.0
      %409 = vmatpush1.msra.mxu0 0.0
      %410 = vmatprep.subr.mxu0 0.0
      %411 = vmatpush1.msra.mxu0 0.0
      %412 = vmatprep.subr.mxu0 0.0
      %413 = vmatpush1.msra.mxu0 0.0
      %414 = vmatprep.subr.mxu0 0.0
      %415 = vmatpush1.msra.mxu0 0.0
      %416 = vmatprep.subr.mxu0 0.0
      %417 = vmatpush1.msra.mxu0 0.0
      %418 = vmatprep.subr.mxu0 0.0
      %419 = vmatpush1.msra.mxu0 0.0
      %420 = vmatprep.subr.mxu0 0.0
      %421 = vmatpush1.msra.mxu0 0.0
      %422 = vmatprep.subr.mxu0 0.0
      %423 = vmatpush1.msra.mxu0 0.0
      %424 = vmatprep.subr.mxu0 0.0
      %425 = vmatpush1.msra.mxu0 0.0
      %426 = vmatprep.subr.mxu0 0.0
      %427 = vmatpush1.msra.mxu0 0.0
      %428 = vmatprep.subr.mxu0 0.0
      %429 = vmatpush1.msra.mxu0 0.0
      %430 = vmatprep.subr.mxu0 0.0
      %431 = vmatpush1.msra.mxu0 0.0
      %432 = vmatprep.subr.mxu0 0.0
      %433 = vmatpush1.msra.mxu0 0.0
      %434 = vmatprep.subr.mxu0 0.0
      %435 = vmatpush1.msra.mxu0 0.0
      %436 = vmatprep.subr.mxu0 0.0
      %437 = vmatpush1.msra.mxu0 0.0
      %438 = vmatprep.subr.mxu0 0.0
      %439 = vmatpush1.msra.mxu0 0.0
      %440 = vmatprep.subr.mxu0 0.0
      %441 = vmatpush1.msra.mxu0 0.0
      %442 = vmatprep.subr.mxu0 0.0
      %443 = vmatpush1.msra.mxu0 0.0
      %444 = vmatprep.mubr.f32.mxu0 0.0
      %445 = vmatmul.mubr.f32.gmra.mrb[0].mxu0 %v378
      %v446 = vpop.f32.mrb[0].mxu0
      %v447 = vadd.f32 0.0, %v446
      %v448 = vpop.f32.mrb[0].mxu0
      %449 = vdwg.mxu0
      %v451 = vsel %vm271, %v356, 0
      %453 = vmatprep.subr.mxu0 0.0
      %454 = vmatpush1.msra.mxu0 %v371
      %455 = vmatprep.subr.mxu0 0.0
      %456 = vmatpush1.msra.mxu0 %v372
      %457 = vmatprep.subr.mxu0 0.0
      %458 = vmatpush1.msra.mxu0 0.0
      %459 = vmatprep.subr.mxu0 0.0
      %460 = vmatpush1.msra.mxu0 0.0
      %461 = vmatprep.subr.mxu0 0.0
      %462 = vmatpush1.msra.mxu0 0.0
      %463 = vmatprep.subr.mxu0 0.0
      %464 = vmatpush1.msra.mxu0 0.0
      %465 = vmatprep.subr.mxu0 0.0
      %466 = vmatpush1.msra.mxu0 0.0
      %467 = vmatprep.subr.mxu0 0.0
      %468 = vmatpush1.msra.mxu0 0.0
      %469 = vmatprep.subr.mxu0 0.0
      %470 = vmatpush1.msra.mxu0 0.0
      %471 = vmatprep.subr.mxu0 0.0
      %472 = vmatpush1.msra.mxu0 0.0
      %473 = vmatprep.subr.mxu0 0.0
      %474 = vmatpush1.msra.mxu0 0.0
      %475 = vmatprep.subr.mxu0 0.0
      %476 = vmatpush1.msra.mxu0 0.0
      %477 = vmatprep.subr.mxu0 0.0
      %478 = vmatpush1.msra.mxu0 0.0
      %479 = vmatprep.subr.mxu0 0.0
      %480 = vmatpush1.msra.mxu0 0.0
      %481 = vmatprep.subr.mxu0 0.0
      %482 = vmatpush1.msra.mxu0 0.0
      %483 = vmatprep.subr.mxu0 0.0
      %484 = vmatpush1.msra.mxu0 0.0
      %485 = vmatprep.subr.mxu0 0.0
      %486 = vmatpush1.msra.mxu0 0.0
      %487 = vmatprep.subr.mxu0 0.0
      %488 = vmatpush1.msra.mxu0 0.0
      %489 = vmatprep.subr.mxu0 0.0
      %490 = vmatpush1.msra.mxu0 0.0
      %491 = vmatprep.subr.mxu0 0.0
      %492 = vmatpush1.msra.mxu0 0.0
      %493 = vmatprep.subr.mxu0 0.0
      %494 = vmatpush1.msra.mxu0 0.0
      %495 = vmatprep.subr.mxu0 0.0
      %496 = vmatpush1.msra.mxu0 0.0
      %497 = vmatprep.subr.mxu0 0.0
      %498 = vmatpush1.msra.mxu0 0.0
      %499 = vmatprep.subr.mxu0 0.0
      %500 = vmatpush1.msra.mxu0 0.0
      %501 = vmatprep.subr.mxu0 0.0
      %502 = vmatpush1.msra.mxu0 0.0
      %503 = vmatprep.subr.mxu0 0.0
      %504 = vmatpush1.msra.mxu0 0.0
      %505 = vmatprep.subr.mxu0 0.0
      %506 = vmatpush1.msra.mxu0 0.0
      %507 = vmatprep.subr.mxu0 0.0
      %508 = vmatpush1.msra.mxu0 0.0
      %509 = vmatprep.subr.mxu0 0.0
      %510 = vmatpush1.msra.mxu0 0.0
      %511 = vmatprep.subr.mxu0 0.0
      %512 = vmatpush1.msra.mxu0 0.0
      %513 = vmatprep.subr.mxu0 0.0
      %514 = vmatpush1.msra.mxu0 0.0
      %515 = vmatprep.subr.mxu0 0.0
      %516 = vmatpush1.msra.mxu0 0.0
      %517 = vmatprep.mubr.f32.mxu0 0.0
      %518 = vmatmul.mubr.f32.gmra.mrb[0].mxu0 %v451
      %v519 = vpop.f32.mrb[0].mxu0
      %v520 = vadd.f32 0.0, %v519
      %v521 = vpop.f32.mrb[0].mxu0
      %522 = vdwg.mxu0
      %v524 = vsel %vm271, %v361, 0
      %526 = vmatprep.subr.mxu0 0.0
      %527 = vmatpush1.msra.mxu0 %v373
      %528 = vmatprep.subr.mxu0 0.0
      %529 = vmatpush1.msra.mxu0 %v374
      %530 = vmatprep.subr.mxu0 0.0
      %531 = vmatpush1.msra.mxu0 0.0
      %532 = vmatprep.subr.mxu0 0.0
      %533 = vmatpush1.msra.mxu0 0.0
      %534 = vmatprep.subr.mxu0 0.0
      %535 = vmatpush1.msra.mxu0 0.0
      %536 = vmatprep.subr.mxu0 0.0
      %537 = vmatpush1.msra.mxu0 0.0
      %538 = vmatprep.subr.mxu0 0.0
      %539 = vmatpush1.msra.mxu0 0.0
      %540 = vmatprep.subr.mxu0 0.0
      %541 = vmatpush1.msra.mxu0 0.0
      %542 = vmatprep.subr.mxu0 0.0
      %543 = vmatpush1.msra.mxu0 0.0
      %544 = vmatprep.subr.mxu0 0.0
      %545 = vmatpush1.msra.mxu0 0.0
      %546 = vmatprep.subr.mxu0 0.0
      %547 = vmatpush1.msra.mxu0 0.0
      %548 = vmatprep.subr.mxu0 0.0
      %549 = vmatpush1.msra.mxu0 0.0
      %550 = vmatprep.subr.mxu0 0.0
      %551 = vmatpush1.msra.mxu0 0.0
      %552 = vmatprep.subr.mxu0 0.0
      %553 = vmatpush1.msra.mxu0 0.0
      %554 = vmatprep.subr.mxu0 0.0
      %555 = vmatpush1.msra.mxu0 0.0
      %556 = vmatprep.subr.mxu0 0.0
      %557 = vmatpush1.msra.mxu0 0.0
      %558 = vmatprep.subr.mxu0 0.0
      %559 = vmatpush1.msra.mxu0 0.0
      %560 = vmatprep.subr.mxu0 0.0
      %561 = vmatpush1.msra.mxu0 0.0
      %562 = vmatprep.subr.mxu0 0.0
      %563 = vmatpush1.msra.mxu0 0.0
      %564 = vmatprep.subr.mxu0 0.0
      %565 = vmatpush1.msra.mxu0 0.0
      %566 = vmatprep.subr.mxu0 0.0
      %567 = vmatpush1.msra.mxu0 0.0
      %568 = vmatprep.subr.mxu0 0.0
      %569 = vmatpush1.msra.mxu0 0.0
      %570 = vmatprep.subr.mxu0 0.0
      %571 = vmatpush1.msra.mxu0 0.0
      %572 = vmatprep.subr.mxu0 0.0
      %573 = vmatpush1.msra.mxu0 0.0
      %574 = vmatprep.subr.mxu0 0.0
      %575 = vmatpush1.msra.mxu0 0.0
      %576 = vmatprep.subr.mxu0 0.0
      %577 = vmatpush1.msra.mxu0 0.0
      %578 = vmatprep.subr.mxu0 0.0
      %579 = vmatpush1.msra.mxu0 0.0
      %580 = vmatprep.subr.mxu0 0.0
      %581 = vmatpush1.msra.mxu0 0.0
      %582 = vmatprep.subr.mxu0 0.0
      %583 = vmatpush1.msra.mxu0 0.0
      %584 = vmatprep.subr.mxu0 0.0
      %585 = vmatpush1.msra.mxu0 0.0
      %586 = vmatprep.subr.mxu0 0.0
      %587 = vmatpush1.msra.mxu0 0.0
      %588 = vmatprep.subr.mxu0 0.0
      %589 = vmatpush1.msra.mxu0 0.0
      %590 = vmatprep.mubr.f32.mxu0 0.0
      %591 = vmatmul.mubr.f32.gmra.mrb[0].mxu0 %v524
      %v592 = vpop.f32.mrb[0].mxu0
      %v593 = vadd.f32 0.0, %v592
      %v594 = vpop.f32.mrb[0].mxu0
      %595 = vdwg.mxu0
      %v597 = vsel %vm271, %v366, 0
      %599 = vmatprep.subr.mxu0 0.0
      %600 = vmatpush1.msra.mxu0 %v375
      %601 = vmatprep.subr.mxu0 0.0
      %602 = vmatpush1.msra.mxu0 %v376
      %603 = vmatprep.subr.mxu0 0.0
      %604 = vmatpush1.msra.mxu0 0.0
      %605 = vmatprep.subr.mxu0 0.0
      %606 = vmatpush1.msra.mxu0 0.0
      %607 = vmatprep.subr.mxu0 0.0
      %608 = vmatpush1.msra.mxu0 0.0
      %609 = vmatprep.subr.mxu0 0.0
      %610 = vmatpush1.msra.mxu0 0.0
      %611 = vmatprep.subr.mxu0 0.0
      %612 = vmatpush1.msra.mxu0 0.0
      %613 = vmatprep.subr.mxu0 0.0
      %614 = vmatpush1.msra.mxu0 0.0
      %615 = vmatprep.subr.mxu0 0.0
      %616 = vmatpush1.msra.mxu0 0.0
      %617 = vmatprep.subr.mxu0 0.0
      %618 = vmatpush1.msra.mxu0 0.0
      %619 = vmatprep.subr.mxu0 0.0
      %620 = vmatpush1.msra.mxu0 0.0
      %621 = vmatprep.subr.mxu0 0.0
      %622 = vmatpush1.msra.mxu0 0.0
      %623 = vmatprep.subr.mxu0 0.0
      %624 = vmatpush1.msra.mxu0 0.0
      %625 = vmatprep.subr.mxu0 0.0
      %626 = vmatpush1.msra.mxu0 0.0
      %627 = vmatprep.subr.mxu0 0.0
      %628 = vmatpush1.msra.mxu0 0.0
      %629 = vmatprep.subr.mxu0 0.0
      %630 = vmatpush1.msra.mxu0 0.0
      %631 = vmatprep.subr.mxu0 0.0
      %632 = vmatpush1.msra.mxu0 0.0
      %633 = vmatprep.subr.mxu0 0.0
      %634 = vmatpush1.msra.mxu0 0.0
      %635 = vmatprep.subr.mxu0 0.0
      %636 = vmatpush1.msra.mxu0 0.0
      %637 = vmatprep.subr.mxu0 0.0
      %638 = vmatpush1.msra.mxu0 0.0
      %639 = vmatprep.subr.mxu0 0.0
      %640 = vmatpush1.msra.mxu0 0.0
      %641 = vmatprep.subr.mxu0 0.0
      %642 = vmatpush1.msra.mxu0 0.0
      %643 = vmatprep.subr.mxu0 0.0
      %644 = vmatpush1.msra.mxu0 0.0
      %645 = vmatprep.subr.mxu0 0.0
      %646 = vmatpush1.msra.mxu0 0.0
      %647 = vmatprep.subr.mxu0 0.0
      %648 = vmatpush1.msra.mxu0 0.0
      %649 = vmatprep.subr.mxu0 0.0
      %650 = vmatpush1.msra.mxu0 0.0
      %651 = vmatprep.subr.mxu0 0.0
      %652 = vmatpush1.msra.mxu0 0.0
      %653 = vmatprep.subr.mxu0 0.0
      %654 = vmatpush1.msra.mxu0 0.0
      %655 = vmatprep.subr.mxu0 0.0
      %656 = vmatpush1.msra.mxu0 0.0
      %657 = vmatprep.subr.mxu0 0.0
      %658 = vmatpush1.msra.mxu0 0.0
      %659 = vmatprep.subr.mxu0 0.0
      %660 = vmatpush1.msra.mxu0 0.0
      %661 = vmatprep.subr.mxu0 0.0
      %662 = vmatpush1.msra.mxu0 0.0
      %663 = vmatprep.mubr.f32.mxu0 0.0
      %664 = vmatmul.mubr.f32.gmra.mrb[0].mxu0 %v597
      %v665 = vpop.f32.mrb[0].mxu0
      %v666 = vadd.f32 0.0, %v665
      %v667 = vpop.f32.mrb[0].mxu0
      %668 = vdwg.mxu0
      %vm669 = vcmask 64512
      %670 = vst.msk [vmem:[%s263] sm:$0xff] %vm669, %v447
      %671 = vst.msk [vmem:[%s263 + $0x8] sm:$0xff] %vm669, %v520
      %672 = vst.msk [vmem:[%s263 + $0x10] sm:$0xff] %vm669, %v593
      %673 = vst.msk [vmem:[%s263 + $0x18] sm:$0xff] %vm669, %v666
      %s674 = smul.u32 4, %s21
      %p675 = scmp.lt.s32.totalorder %s19, 1
      %s676 = scalar_select %p675, %s19, 1
      %p677 = scmp.lt.s32.totalorder %s20, 3
      %s678 = scalar_select %p677, %s20, 3
      %p679 = scmp.lt.s32.totalorder %s674, 3
      %s680 = scalar_select %p679, %s674, 3
      %s681 = smul.addr %s678, 4
      %s682 = sadd.s32 %s680, %s681
      %s683 = smul.addr %s676, 16
      %s684 = sadd.s32 %s682, %s683
      %s685 = smul.addr %s684, 8
      %s686 = scalar_lea.vmem %s3, %s685
      // Predicated region
      $region33: #{_make_cutouts.1} parent=31 // pred_check
        %p687 = pneg %p135
      $region34: #{_make_cutouts.1} parent=31 // pred_check_branch
        %689 = sbr.rel (%p687) target = $region36
      $region35: #{_make_cutouts.1} parent=31 // pred_region
        %s690 = smul.u32 4, %s21
      $region36: #{_make_cutouts.1} parent=31 // pred_fallthru
        _
    $region32: #{_make_cutouts.1} parent=5 // pred_fallthru
      _
    %p691 = scmp.le.s32.totalorder 2, %s9
    // Predicated region
    $region37: #{_make_cutouts.1} parent=5 // pred_check
      %p692 = pneg %p691
    $region38: #{_make_cutouts.1} parent=5 // pred_check_branch
      %694 = sbr.rel (%p692) target = $region40
    $region39: #{_make_cutouts.1} parent=5 // pred_region
      %s695 = ssub.s32 %s9, 2
      // Predicated region
      $region41: #{_make_cutouts.1} parent=39 // pred_check
        %p696 = pneg %p141
      $region42: #{_make_cutouts.1} parent=39 // pred_check_branch
        %698 = sbr.rel (%p696) target = $region44
      $region43: #{_make_cutouts.1} parent=39 // pred_region
        %s699 = smul.u32 4, %s24
        %p700 = scmp.lt.s32.totalorder %s22, 1
        %s701 = scalar_select %p700, %s22, 1
        %p702 = scmp.lt.s32.totalorder %s23, 3
        %s703 = scalar_select %p702, %s23, 3
        %p704 = scmp.lt.s32.totalorder %s699, 3
        %s705 = scalar_select %p704, %s699, 3
        %s706 = smul.addr %s703, 4
        %s707 = sadd.s32 %s705, %s706
        %s708 = smul.addr %s701, 16
        %s709 = sadd.s32 %s707, %s708
        %s710 = smul.addr %s709, 8
        %s711 = scalar_lea.vmem %s3, %s710
      $region44: #{_make_cutouts.1} parent=39 // pred_fallthru
        _
    $region40: #{_make_cutouts.1} parent=5 // pred_fallthru
      _
  $region6: #{_make_cutouts.1} parent=0 // loop_footer
    %s13 = sadd.s32 1, %s9
  $region7: #{_make_cutouts.1} parent=0 // loop_footer_branch
    %8 = sbr.rel target = $region3
  $region8: #{_make_cutouts.1} parent=0 // loop_exit
    _

</llo_original>
